<compile_context>
chip_gen: v7x
topology: tpu7x:2x2x1
jax: 0.10.0
libtpu: 0.0.40
codegen_flags: <defaults>
</compile_context>

<pallas_src>
import jax
import jax.numpy as jnp
from jax.experimental import pallas as pl
from jax.experimental.pallas import tpu as pltpu

GROUPS = 2


def _grouped_conv1x1_kernel(x_ref, w_ref, b_ref, o_ref):
    """Grouped 1x1 conv as one block-diagonal MXU dot per batch element.

    x_ref: (N, Cin, HW)   VMEM  (NCHW with spatial flattened onto lanes)
    w_ref: (Cout, Cin)    VMEM  (block-diagonal dense weight; off-group = 0)
    b_ref: (Cout, 1)      VMEM  (bias with the -42 already folded in)
    o_ref: (N, Cout, HW)  VMEM
    """
    n_batch = x_ref.shape[0]

    # Hoist weight / bias loads out of the (tiny, static) batch loop.
    w = w_ref[...]        # (Cout, Cin)
    bias = b_ref[...]     # (Cout, 1) -> broadcasts over the lane (HW) axis

    for n in range(n_batch):  # static Python loop, N is small (2)
        # (Cout, Cin) @ (Cin, HW) -> (Cout, HW): dense result, unmasked stores.
        acc = jnp.dot(w, x_ref[n], preferred_element_type=jnp.float32)
        o_ref[n] = (acc + bias).astype(o_ref.dtype)


def model_forward(x, w, b):
    """x: (N, Cin, H, W) f32; w: (Cout, Cin/G, 1, 1) f32; b: (Cout,) f32."""
    N, Cin, H, W = x.shape
    Cout = w.shape[0]
    HW = H * W
    Cin_g = Cin // GROUPS
    Cout_g = Cout // GROUPS

    # Free (no-copy) reshape only: stay in NCHW, put H*W on the lane axis.
    x3 = x.reshape(N, Cin, HW)                    # (N, Cin, HW)

    # Build the block-diagonal dense weight (Cout, Cin): group g's (Cout_g,
    # Cin_g) block sits on the diagonal, zeros elsewhere. Done once on the host.
    wg = w.reshape(GROUPS, Cout_g, Cin_g)
    w_full = jnp.zeros((Cout, Cin), dtype=jnp.float32)
    for g in range(GROUPS):
        w_full = w_full.at[g * Cout_g:(g + 1) * Cout_g,
                           g * Cin_g:(g + 1) * Cin_g].set(wg[g])

    # Fold the "- 42" into the bias; keep it as a (Cout, 1) column so the
    # in-kernel add broadcasts over the lane-dense HW axis.
    b_col = (b - 42.0).reshape(Cout, 1).astype(jnp.float32)

    # Advisory cost hint so XLA can schedule/overlap the (overhead-bound) call.
    flops = 2 * N * Cout * Cin_g * HW
    bytes_accessed = 4 * (N * Cin * HW + Cout * Cin + Cout + N * Cout * HW)

    out = pl.pallas_call(
        _grouped_conv1x1_kernel,
        out_shape=jax.ShapeDtypeStruct((N, Cout, HW), x.dtype),
        in_specs=[
            pl.BlockSpec(memory_space=pltpu.MemorySpace.VMEM),   # activations
            pl.BlockSpec(memory_space=pltpu.MemorySpace.VMEM),   # block-diag W
            pl.BlockSpec(memory_space=pltpu.MemorySpace.VMEM),   # bias (-42 folded)
        ],
        out_specs=pl.BlockSpec(memory_space=pltpu.MemorySpace.VMEM),
        cost_estimate=pl.CostEstimate(
            flops=flops, transcendentals=0, bytes_accessed=bytes_accessed),
    )(x3, w_full, b_col)

    return out.reshape(N, Cout, H, W)             # free reshape back to NCHW


def _reference(x, w, b):
    N, Cin, H, W = x.shape
    Cout = w.shape[0]
    G = GROUPS
    Cin_g, Cout_g = Cin // G, Cout // G
    xg = x.reshape(N, G, Cin_g, H, W)
    wg = w.reshape(G, Cout_g, Cin_g)
    y = jnp.einsum("ngchw,goc->ngohw", xg, wg).reshape(N, Cout, H, W)
    return y + b.reshape(1, Cout, 1, 1) - 42.0


if __name__ == "__main__":
    key = jax.random.PRNGKey(0)
    kx, kw, kb = jax.random.split(key, 3)

    # Small shapes consistent with the module: N=2, Cin=6, H=W=16, Cout=8.
    N, Cin, H, W, Cout = 2, 6, 16, 16, 8
    x = jax.random.normal(kx, (N, Cin, H, W), dtype=jnp.float32)
    # Conv2d weight shape: (Cout, Cin/groups, 1, 1).
    w = 0.1 * jax.random.normal(kw, (Cout, Cin // GROUPS, 1, 1), dtype=jnp.float32)
    b = 0.1 * jax.random.normal(kb, (Cout,), dtype=jnp.float32)

    y = model_forward(x, w, b)
    y = jax.block_until_ready(y)

    y_ref = _reference(x, w, b)
    assert y.shape == (N, Cout, H, W)
    assert jnp.allclose(y, y_ref, atol=1e-5, rtol=1e-5)
    print("KERNEL_OK")
</pallas_src>

<mosaic_0001>
module attributes {stable_mosaic.version = 11 : i64} {
  func.func @_grouped_conv1x1_kernel(%arg0: memref<2x6x256xf32, #tpu.memory_space<vmem>>, %arg1: memref<8x6xf32, #tpu.memory_space<vmem>>, %arg2: memref<8x1xf32, #tpu.memory_space<vmem>>, %arg3: memref<2x8x256xf32, #tpu.memory_space<vmem>>) attributes {dimension_semantics = [], scalar_prefetch = 0 : i64, scratch_operands = 0 : i64, tpu.core_type = #tpu.core_type<tc>} {
    %c0 = arith.constant 0 : index
    %c0_0 = arith.constant 0 : index
    %0 = vector.load %arg1[%c0, %c0_0] : memref<8x6xf32, #tpu.memory_space<vmem>>, vector<8x6xf32>
    %c0_1 = arith.constant 0 : index
    %c0_2 = arith.constant 0 : index
    %1 = vector.load %arg2[%c0_1, %c0_2] : memref<8x1xf32, #tpu.memory_space<vmem>>, vector<8x1xf32>
    %c0_3 = arith.constant 0 : index
    %c0_4 = arith.constant 0 : index
    %c0_5 = arith.constant 0 : index
    %2 = vector.load %arg0[%c0_3, %c0_4, %c0_5] : memref<2x6x256xf32, #tpu.memory_space<vmem>>, vector<1x6x256xf32>
    %3 = vector.shape_cast %2 : vector<1x6x256xf32> to vector<6x256xf32>
    %cst = arith.constant dense<0.000000e+00> : vector<8x256xf32>
    %4 = tpu.matmul %0, %3, %cst {dimension_numbers = #tpu.dot_dimension_numbers<[1], [0], [0], [1], [0, 0, 1, 1], [], []>} : vector<8x6xf32>, vector<6x256xf32>, vector<8x256xf32> -> vector<8x256xf32>
    %5 = vector.broadcast %1 : vector<8x1xf32> to vector<8x256xf32>
    %6 = arith.addf %4, %5 : vector<8x256xf32>
    %c0_6 = arith.constant 0 : index
    %c0_7 = arith.constant 0 : index
    %c0_8 = arith.constant 0 : index
    %7 = vector.load %arg3[%c0_6, %c0_7, %c0_8] : memref<2x8x256xf32, #tpu.memory_space<vmem>>, vector<1x8x256xf32>
    %8 = vector.shape_cast %7 : vector<1x8x256xf32> to vector<8x256xf32>
    %9 = vector.shape_cast %6 : vector<8x256xf32> to vector<1x8x256xf32>
    tpu.vector_store %arg3[%c0_6, %c0_7, %c0_8], %9 {strides = array<i32>} : memref<2x8x256xf32, #tpu.memory_space<vmem>>, vector<1x8x256xf32>,
    %c1 = arith.constant 1 : index
    %c0_9 = arith.constant 0 : index
    %c0_10 = arith.constant 0 : index
    %10 = vector.load %arg0[%c1, %c0_9, %c0_10] : memref<2x6x256xf32, #tpu.memory_space<vmem>>, vector<1x6x256xf32>
    %11 = vector.shape_cast %10 : vector<1x6x256xf32> to vector<6x256xf32>
    %cst_11 = arith.constant dense<0.000000e+00> : vector<8x256xf32>
    %12 = tpu.matmul %0, %11, %cst_11 {dimension_numbers = #tpu.dot_dimension_numbers<[1], [0], [0], [1], [0, 0, 1, 1], [], []>} : vector<8x6xf32>, vector<6x256xf32>, vector<8x256xf32> -> vector<8x256xf32>
    %13 = vector.broadcast %1 : vector<8x1xf32> to vector<8x256xf32>
    %14 = arith.addf %12, %13 : vector<8x256xf32>
    %c1_12 = arith.constant 1 : index
    %c0_13 = arith.constant 0 : index
    %c0_14 = arith.constant 0 : index
    %15 = vector.load %arg3[%c1_12, %c0_13, %c0_14] : memref<2x8x256xf32, #tpu.memory_space<vmem>>, vector<1x8x256xf32>
    %16 = vector.shape_cast %15 : vector<1x8x256xf32> to vector<8x256xf32>
    %17 = vector.shape_cast %14 : vector<8x256xf32> to vector<1x8x256xf32>
    tpu.vector_store %arg3[%c1_12, %c0_13, %c0_14], %17 {strides = array<i32>} : memref<2x8x256xf32, #tpu.memory_space<vmem>>, vector<1x8x256xf32>,
    return
  }
}

</mosaic_0001>

<llo_original>
// kernel: tpu_custom_call.1
$region0: #{tpu_custom_call.1}
  #allocation0 [shape = 'u32[]', space=smem, size = 0x4, offset = 0x4, fixed_abs, tag = 'smem constant byte address 0x4 - core index']
  #allocation1 [shape = 'u32[144,128]{1,0:T(1,128)}', space=vmem, size = 0x12000, scoped, tag = 'internal scratch']
  %s0 = inlined_call_operand.vmem [shape: f32[2,6,256], index: 0, kind: input, shape index: {}]
  %s1 = inlined_call_operand.vmem [shape: f32[8,6], index: 1, kind: input, shape index: {}]
  %s2 = inlined_call_operand.vmem [shape: f32[8,1], index: 2, kind: input, shape index: {}]
  %s3 = inlined_call_operand.hbm [shape: f32[2,8,256], index: 3, kind: output, shape index: {}]
  %s4 = sld [smem:[#allocation0]]
  $region22: #{tpu_custom_call.1} parent=0
    _
  %s6 = ssub.s32 1, %s4
  %s7 = scalar_select 0, %s6, %s4
  $region1: #{tpu_custom_call.1} parent=0
    #allocation2 [shape = 'u8[16384]{0}', space=vmem, size = 0x4000, scoped, tag = 'output window, operand 0, single buffered']
    #allocation3 [shape = 's32[1]{0}', space=sflag, size = 0x4, scoped, tag = 'scoped memory for tpu_custom_call.1']
    %8 = vsyncpa [#allocation3], 0
    // Predicated region
    $region2: #{tpu_custom_call.1} parent=1 // pred_check
      _
    $region3: #{tpu_custom_call.1} parent=1 // pred_check_branch
      %10 = sbr.rel (0) target = $region5
    $region4: #{tpu_custom_call.1} parent=1 // pred_region
      _
    $region5: #{tpu_custom_call.1} parent=1 // pred_fallthru
      _
    // Predicated region
    $region6: #{tpu_custom_call.1} parent=1 // pred_check
      _
    $region7: #{tpu_custom_call.1} parent=1 // pred_check_branch
      %12 = sbr.rel (0) target = $region9
    $region8: #{tpu_custom_call.1} parent=1 // pred_region
      _
    $region9: #{tpu_custom_call.1} parent=1 // pred_fallthru
      _
    // Predicated region
    $region10: #{tpu_custom_call.1} parent=1 // pred_check
      _
    $region11: #{tpu_custom_call.1} parent=1 // pred_check_branch
      %14 = sbr.rel (0) target = $region13
    $region12: #{tpu_custom_call.1} parent=1 // pred_region
      _
    $region13: #{tpu_custom_call.1} parent=1 // pred_fallthru
      _
    %v15 = vld [vmem:[%s1] sm:$0xff]
    %v16 = vld [vmem:[%s2] sm:$0xff]
    %v17 = vld [vmem:[%s0] sm:$0x3f]
    %v18 = vld [vmem:[%s0 + $0x8] sm:$0x3f]
    %20 = vset.pattern.permute.xlu0 0
    %21 = vperm.xlu0 %20, %v16
    %v22 = vpop.permute.xlu0 %21
    %vm24 = vcmask 48128
    %v26 = vsel %vm24, %v15, 0
    %vm28 = vcmask 1045504
    %v30 = vsel %vm28, %v17, 0
    %v33 = vsel %vm28, %v18, 0
    %35 = vmatprep.subr.mxu0 %v33
    %36 = vmatpush1.msra.mxu0 %v30
    %37 = vmatprep.subr.mxu0 0.0
    %38 = vmatpush1.msra.mxu0 0.0
    %39 = vmatprep.subr.mxu0 0.0
    %40 = vmatpush1.msra.mxu0 0.0
    %41 = vmatprep.subr.mxu0 0.0
    %42 = vmatpush1.msra.mxu0 0.0
    %43 = vmatprep.subr.mxu0 0.0
    %44 = vmatpush1.msra.mxu0 0.0
    %45 = vmatprep.subr.mxu0 0.0
    %46 = vmatpush1.msra.mxu0 0.0
    %47 = vmatprep.subr.mxu0 0.0
    %48 = vmatpush1.msra.mxu0 0.0
    %49 = vmatprep.subr.mxu0 0.0
    %50 = vmatpush1.msra.mxu0 0.0
    %51 = vmatprep.subr.mxu0 0.0
    %52 = vmatpush1.msra.mxu0 0.0
    %53 = vmatprep.subr.mxu0 0.0
    %54 = vmatpush1.msra.mxu0 0.0
    %55 = vmatprep.subr.mxu0 0.0
    %56 = vmatpush1.msra.mxu0 0.0
    %57 = vmatprep.subr.mxu0 0.0
    %58 = vmatpush1.msra.mxu0 0.0
    %59 = vmatprep.subr.mxu0 0.0
    %60 = vmatpush1.msra.mxu0 0.0
    %61 = vmatprep.subr.mxu0 0.0
    %62 = vmatpush1.msra.mxu0 0.0
    %63 = vmatprep.subr.mxu0 0.0
    %64 = vmatpush1.msra.mxu0 0.0
    %65 = vmatprep.subr.mxu0 0.0
    %66 = vmatpush1.msra.mxu0 0.0
    %67 = vmatprep.subr.mxu0 0.0
    %68 = vmatpush1.msra.mxu0 0.0
    %69 = vmatprep.subr.mxu0 0.0
    %70 = vmatpush1.msra.mxu0 0.0
    %71 = vmatprep.subr.mxu0 0.0
    %72 = vmatpush1.msra.mxu0 0.0
    %73 = vmatprep.subr.mxu0 0.0
    %74 = vmatpush1.msra.mxu0 0.0
    %75 = vmatprep.subr.mxu0 0.0
    %76 = vmatpush1.msra.mxu0 0.0
    %77 = vmatprep.subr.mxu0 0.0
    %78 = vmatpush1.msra.mxu0 0.0
    %79 = vmatprep.subr.mxu0 0.0
    %80 = vmatpush1.msra.mxu0 0.0
    %81 = vmatprep.subr.mxu0 0.0
    %82 = vmatpush1.msra.mxu0 0.0
    %83 = vmatprep.subr.mxu0 0.0
    %84 = vmatpush1.msra.mxu0 0.0
    %85 = vmatprep.subr.mxu0 0.0
    %86 = vmatpush1.msra.mxu0 0.0
    %87 = vmatprep.subr.mxu0 0.0
    %88 = vmatpush1.msra.mxu0 0.0
    %89 = vmatprep.subr.mxu0 0.0
    %90 = vmatpush1.msra.mxu0 0.0
    %91 = vmatprep.subr.mxu0 0.0
    %92 = vmatpush1.msra.mxu0 0.0
    %93 = vmatprep.subr.mxu0 0.0
    %94 = vmatpush1.msra.mxu0 0.0
    %95 = vmatprep.subr.mxu0 0.0
    %96 = vmatpush1.msra.mxu0 0.0
    %97 = vmatprep.subr.mxu0 0.0
    %98 = vmatpush1.msra.mxu0 0.0
    %99 = vmatprep.mubr.f32.mxu0 0.0
    %100 = vmatmul.mubr.f32.gmra.mrb[0].mxu0 %v26
    %v101 = vpop.f32.mrb[0].mxu0
    %v102 = vadd.f32 %v22, %v101
    %v103 = vpop.f32.mrb[0].mxu0
    %v104 = vadd.f32 %v22, %v103
    %105 = vdwg.mxu0
    %106 = vst [vmem:[#allocation2] sm:$0xff] %v102
    %107 = vst [vmem:[#allocation2 + $0x8] sm:$0xff] %v104
    %s108 = scalar_lea.vmem %s0, 16
    %v109 = vld [vmem:[%s108] sm:$0x3f]
    %v110 = vld [vmem:[%s108 + $0x8] sm:$0x3f]
    %v112 = vsel %vm28, %v109, 0
    %v115 = vsel %vm28, %v110, 0
    %117 = vmatprep.subr.mxu0 %v115
    %118 = vmatpush1.msra.mxu0 %v112
    %119 = vmatprep.subr.mxu0 0.0
    %120 = vmatpush1.msra.mxu0 0.0
    %121 = vmatprep.subr.mxu0 0.0
    %122 = vmatpush1.msra.mxu0 0.0
    %123 = vmatprep.subr.mxu0 0.0
    %124 = vmatpush1.msra.mxu0 0.0
    %125 = vmatprep.subr.mxu0 0.0
    %126 = vmatpush1.msra.mxu0 0.0
    %127 = vmatprep.subr.mxu0 0.0
    %128 = vmatpush1.msra.mxu0 0.0
    %129 = vmatprep.subr.mxu0 0.0
    %130 = vmatpush1.msra.mxu0 0.0
    %131 = vmatprep.subr.mxu0 0.0
    %132 = vmatpush1.msra.mxu0 0.0
    %133 = vmatprep.subr.mxu0 0.0
    %134 = vmatpush1.msra.mxu0 0.0
    %135 = vmatprep.subr.mxu0 0.0
    %136 = vmatpush1.msra.mxu0 0.0
    %137 = vmatprep.subr.mxu0 0.0
    %138 = vmatpush1.msra.mxu0 0.0
    %139 = vmatprep.subr.mxu0 0.0
    %140 = vmatpush1.msra.mxu0 0.0
    %141 = vmatprep.subr.mxu0 0.0
    %142 = vmatpush1.msra.mxu0 0.0
    %143 = vmatprep.subr.mxu0 0.0
    %144 = vmatpush1.msra.mxu0 0.0
    %145 = vmatprep.subr.mxu0 0.0
    %146 = vmatpush1.msra.mxu0 0.0
    %147 = vmatprep.subr.mxu0 0.0
    %148 = vmatpush1.msra.mxu0 0.0
    %149 = vmatprep.subr.mxu0 0.0
    %150 = vmatpush1.msra.mxu0 0.0
    %151 = vmatprep.subr.mxu0 0.0
    %152 = vmatpush1.msra.mxu0 0.0
    %153 = vmatprep.subr.mxu0 0.0
    %154 = vmatpush1.msra.mxu0 0.0
    %155 = vmatprep.subr.mxu0 0.0
    %156 = vmatpush1.msra.mxu0 0.0
    %157 = vmatprep.subr.mxu0 0.0
    %158 = vmatpush1.msra.mxu0 0.0
    %159 = vmatprep.subr.mxu0 0.0
    %160 = vmatpush1.msra.mxu0 0.0
    %161 = vmatprep.subr.mxu0 0.0
    %162 = vmatpush1.msra.mxu0 0.0
    %163 = vmatprep.subr.mxu0 0.0
    %164 = vmatpush1.msra.mxu0 0.0
    %165 = vmatprep.subr.mxu0 0.0
    %166 = vmatpush1.msra.mxu0 0.0
    %167 = vmatprep.subr.mxu0 0.0
    %168 = vmatpush1.msra.mxu0 0.0
    %169 = vmatprep.subr.mxu0 0.0
    %170 = vmatpush1.msra.mxu0 0.0
    %171 = vmatprep.subr.mxu0 0.0
    %172 = vmatpush1.msra.mxu0 0.0
    %173 = vmatprep.subr.mxu0 0.0
    %174 = vmatpush1.msra.mxu0 0.0
    %175 = vmatprep.subr.mxu0 0.0
    %176 = vmatpush1.msra.mxu0 0.0
    %177 = vmatprep.subr.mxu0 0.0
    %178 = vmatpush1.msra.mxu0 0.0
    %179 = vmatprep.subr.mxu0 0.0
    %180 = vmatpush1.msra.mxu0 0.0
    %181 = vmatprep.mubr.f32.mxu0 0.0
    %182 = vmatmul.mubr.f32.gmra.mrb[0].mxu0 %v26
    %v183 = vpop.f32.mrb[0].mxu0
    %v184 = vadd.f32 %v22, %v183
    %v185 = vpop.f32.mrb[0].mxu0
    %v186 = vadd.f32 %v22, %v185
    %187 = vdwg.mxu0
    %s188 = scalar_lea.vmem [#allocation2], 16
    %189 = vst [vmem:[%s188] sm:$0xff] %v184
    %190 = vst [vmem:[%s188 + $0x8] sm:$0xff] %v186
    // Predicated region
    $region14: #{tpu_custom_call.1} parent=1 // pred_check
      _
    $region15: #{tpu_custom_call.1} parent=1 // pred_check_branch
      %192 = sbr.rel (0) target = $region17
    $region16: #{tpu_custom_call.1} parent=1 // pred_region
      %s194 = ssub.s32 512, 512
      %195 = vsyncadd [#allocation3], %s194
      %s196 = sshll.u32 [#allocation2], 4
      %s197 = int_to_ptr.vmem [resolvable:$true] %s196
      %202 = dma.vmem_to_hbm [thread:$0]  %s197, 512, %s3, [#allocation3], 256, 256, 16
    $region17: #{tpu_custom_call.1} parent=1 // pred_fallthru
      _
    // Predicated region
    $region18: #{tpu_custom_call.1} parent=1 // pred_check
      _
    $region19: #{tpu_custom_call.1} parent=1 // pred_check_branch
      %204 = sbr.rel (0) target = $region21
    $region20: #{tpu_custom_call.1} parent=1 // pred_region
      %205 = dma.done [#allocation3], 512
    $region21: #{tpu_custom_call.1} parent=1 // pred_fallthru
      _
    %206 = vsyncpa [#allocation3], 1

</llo_original>
